<compile_context>
chip_gen: v5e
topology: v5e:2x2
jax: 0.10.0
libtpu: 0.0.40
codegen_flags: <defaults>
</compile_context>

<pallas_src>
import functools

import jax
import jax.numpy as jnp
from jax import lax
from jax.experimental import pallas as pl
from jax.experimental.pallas import tpu as pltpu


# ---------------------------------------------------------------------------
# Kernels
# ---------------------------------------------------------------------------

def _pad_neumann_dirichlet_kernel(x_ref, o_ref):
    # x_ref: (CB, H, W)  ->  o_ref: (CB, H+2, W+2)
    CB, H, W = x_ref.shape
    x = x_ref[...]

    # 1) Interior: straight copy into the (1:H+1, 1:W+1) window.
    o_ref[:, 1:H + 1, 1:W + 1] = x

    # 2) Top / bottom replicated rows (interior width, not negated).
    o_ref[:, 0:1, 1:W + 1] = x[:, 0:1, :]
    o_ref[:, H + 1:H + 2, 1:W + 1] = x[:, H - 1:H, :]

    # 3) Full-height left / right columns, one store each (column + both
    #    corners merged).  The (CB, H+2, 1) column value is assembled by
    #    reading back the adjacent, already-written output column and patching
    #    its two (so far uninitialized) end rows with the replicated corner
    #    values -- no unaligned sublane concatenates needed.
    rows = lax.broadcasted_iota(jnp.int32, (CB, H + 2, 1), 1)
    is_top = rows == 0
    is_bot = rows == H + 1

    inner_l = o_ref[:, :, 1:2]            # rows 1..H now hold x[:, :, 0]
    left = jnp.where(is_top, x[:, 0:1, 0:1],
                     jnp.where(is_bot, x[:, H - 1:H, 0:1], inner_l))
    o_ref[:, :, 0:1] = -left

    inner_r = o_ref[:, :, W:W + 1]        # rows 1..H now hold x[:, :, W-1]
    right = jnp.where(is_top, x[:, 0:1, W - 1:W],
                      jnp.where(is_bot, x[:, H - 1:H, W - 1:W], inner_r))
    o_ref[:, :, W + 1:W + 2] = -right


def _pad_same_kernel(x_ref, o_ref):
    # x_ref: (CB, H, W)  ->  o_ref: (CB, H+2, W+2)
    CB, H, W = x_ref.shape

    if W + 2 > 128:
        # Lane-dense regime: zero only the 1-wide border and copy the
        # interior; the full-block zero would nearly double the VMEM store
        # volume (vst is the binding slot).
        o_ref[:, 1:H + 1, 1:W + 1] = x_ref[...]
        zrow = jnp.zeros((CB, 1, W + 2), dtype=o_ref.dtype)
        zcol = jnp.zeros((CB, H, 1), dtype=o_ref.dtype)
        o_ref[:, 0:1, :] = zrow
        o_ref[:, H + 1:H + 2, :] = zrow
        o_ref[:, 1:H + 1, 0:1] = zcol
        o_ref[:, 1:H + 1, W + 1:W + 2] = zcol
    else:
        # Small W (single masked lane group per row): the full-block zero
        # splat is ~3 masked vst per channel -- fewer store ops than four
        # separate border stores, so it wins here.
        o_ref[...] = jnp.zeros_like(o_ref)
        o_ref[:, 1:H + 1, 1:W + 1] = x_ref[...]


# ---------------------------------------------------------------------------
# Block-size heuristics (padded-VMEM accounting, generation aware)
# ---------------------------------------------------------------------------

@functools.lru_cache(maxsize=1)
def _tpu_info():
    """(tensorcores_per_chip, vmem_capacity_bytes) with safe fallbacks."""
    cores, vmem = 1, 128 << 20
    try:
        info = pltpu.get_tpu_info()
    except Exception:
        return cores, vmem
    for name in ("num_cores", "num_tensorcores", "tensorcores_per_chip",
                 "cores_per_chip", "core_count"):
        v = getattr(info, name, None)
        if isinstance(v, int) and v > 0:
            cores = v
            break
    v = getattr(info, "vmem_capacity_bytes", None)
    if isinstance(v, int) and v > 0:
        vmem = v
    return cores, vmem


def _padded_channel_bytes(H, W, dtype):
    """VMEM bytes one channel of (input + output) actually occupies once the
    last two dims are rounded up to the (sublane, 128-lane) hardware tile."""
    itemsize = jnp.dtype(dtype).itemsize
    sub = max(8, 32 // max(itemsize, 1))     # 8 f32 / 16 bf16 / 32 int8
    def tile(h, w):
        return pl.cdiv(h, sub) * sub * pl.cdiv(w, 128) * 128 * itemsize
    return tile(H, W) + tile(H + 2, W + 2)


def _choose_channel_block(nc, per_ch_bytes, num_cores, vmem_capacity):
    """Largest cb whose double-buffered (in+out) *padded* footprint fits the
    generation-aware budget; on multi-TensorCore chips also force >=2 grid
    steps (best-effort even count) so the 'parallel' axis load-balances."""
    if num_cores >= 2:
        # v7x-style: 64 MiB VMEM per TC -> keep the 2-deep pipeline well
        # inside it (~24-32 MiB double-buffered).
        budget = min(28 << 20, vmem_capacity // 2)
    else:
        # v5e / v6e: single TC, 128 MiB physical VMEM; ~8 MiB (in+out)
        # blocks -> ~16 MiB double-buffered.
        budget = 16 << 20
    cb = max(1, min(nc, budget // max(2 * per_ch_bytes, 1)))

    if num_cores >= 2 and nc >= 2:
        # At least one block per core; go to >=4 steps only if blocks stay
        # reasonably fat (>= 256 KiB padded), then prefer an even step count.
        min_steps = 2
        if nc >= 4 and (nc // 4) * per_ch_bytes >= (256 << 10):
            min_steps = 4
        cb = min(cb, pl.cdiv(nc, min_steps))
        steps = pl.cdiv(nc, cb)
        if steps > 1 and steps % 2 == 1:
            cb_even = max(1, pl.cdiv(nc, steps + 1))
            if pl.cdiv(nc, cb_even) % 2 == 0:
                cb = cb_even
    elif nc >= 3 and (nc // 3) * per_ch_bytes >= (2 << 20):
        # Single TC: keep >=3 steps only when blocks stay multi-MiB, so the
        # in/out DMAs of adjacent steps overlap; otherwise one fat step wins
        # (per-step overhead dominates tiny problems).
        cb = min(cb, pl.cdiv(nc, 3))
    return max(1, cb)


# ---------------------------------------------------------------------------
# Wrapper
# ---------------------------------------------------------------------------

def pad(x, padding_type=('neumann', 'dirichlet'), *, channel_block=None):
    """Forward pass of the Pad module. x: (N, C, H, W) -> (N, C, H+2, W+2)."""
    N, C, H, W = x.shape
    pt = list(padding_type)
    if pt == ['same']:
        kernel = _pad_same_kernel
    elif pt == ['neumann', 'dirichlet']:
        kernel = _pad_neumann_dirichlet_kernel
    else:
        raise NotImplementedError('Padding type not implemented')

    NC = N * C
    xf = x.reshape(NC, H, W)                 # contiguous reshape: free

    num_cores, vmem_capacity = _tpu_info()
    per_ch_bytes = _padded_channel_bytes(H, W, x.dtype)
    if channel_block is None:
        cb = _choose_channel_block(NC, per_ch_bytes, num_cores, vmem_capacity)
    else:
        cb = channel_block
    cb = max(1, min(cb, NC))
    steps = pl.cdiv(NC, cb)                  # cb need not divide NC

    # Raise the scoped-VMEM limit if the double-buffered padded blocks need
    # it (scoped default is 16 MiB on v5e, 32 MiB on v6e/v7x).
    required = 2 * cb * per_ch_bytes + (2 << 20)
    vmem_limit = int(min(max(required, 32 << 20), (vmem_capacity * 3) // 4))
    vmem_limit = max(vmem_limit, int(required))

    out = pl.pallas_call(
        kernel,
        out_shape=jax.ShapeDtypeStruct((NC, H + 2, W + 2), x.dtype),
        grid=(steps,),
        in_specs=[pl.BlockSpec((cb, H, W), lambda i: (i, 0, 0))],
        out_specs=pl.BlockSpec((cb, H + 2, W + 2), lambda i: (i, 0, 0)),
        compiler_params=pltpu.CompilerParams(
            dimension_semantics=("parallel",),
            vmem_limit_bytes=vmem_limit),
    )(xf)
    return out.reshape(N, C, H + 2, W + 2)


def _pad_ref(x, padding_type=('neumann', 'dirichlet')):
    """Pure-JAX reference matching the PyTorch module semantics."""
    pt = list(padding_type)
    if pt == ['same']:
        return jnp.pad(x, ((0, 0), (0, 0), (1, 1), (1, 1)),
                       mode='constant', constant_values=0)
    elif pt == ['neumann', 'dirichlet']:
        y = jnp.pad(x, ((0, 0), (0, 0), (1, 1), (1, 1)), mode='edge')
        y = y.at[..., -1].set(-y[..., -1])
        y = y.at[..., 0].set(-y[..., 0])
        return y
    else:
        raise NotImplementedError('Padding type not implemented')


if __name__ == "__main__":
    key = jax.random.PRNGKey(0)
    x = jax.random.normal(key, (2, 4, 16, 16), dtype=jnp.float32)

    # default mode: ['neumann', 'dirichlet']
    y = pad(x)
    jax.block_until_ready(y)
    assert y.shape == (2, 4, 18, 18)
    assert jnp.allclose(y, _pad_ref(x)), "neumann/dirichlet padding mismatch"

    # 'same' mode
    y_same = pad(x, padding_type=('same',))
    jax.block_until_ready(y_same)
    assert jnp.allclose(y_same, _pad_ref(x, padding_type=('same',))), \
        "'same' padding mismatch"

    # Ragged last block: channel block that does not divide N*C=8 (exercises
    # the pl.cdiv grid path: OOB channel reads unused, OOB writes dropped).
    y_rag = pad(x, channel_block=3)
    jax.block_until_ready(y_rag)
    assert jnp.allclose(y_rag, _pad_ref(x)), "ragged-block padding mismatch"

    print("KERNEL_OK")
</pallas_src>

<mosaic_0001>
module attributes {stable_mosaic.version = 11 : i64} {
  func.func @_pad_neumann_dirichlet_kernel(%arg0: i32, %arg1: memref<8x16x16xf32, #tpu.memory_space<vmem>>, %arg2: memref<8x18x18xf32, #tpu.memory_space<vmem>>) attributes {dimension_semantics = [#tpu.dimension_semantics<parallel>], iteration_bounds = array<i64: 1>, scalar_prefetch = 0 : i64, scratch_operands = 0 : i64, tpu.core_type = #tpu.core_type<tc>, window_params = [{transform_indices = @transform_0, window_bounds = array<i64: 8, 16, 16>}, {transform_indices = @transform_1, window_bounds = array<i64: 8, 18, 18>}]} {
    %c0 = arith.constant 0 : index
    %c0_0 = arith.constant 0 : index
    %c0_1 = arith.constant 0 : index
    %0 = vector.load %arg1[%c0, %c0_0, %c0_1] : memref<8x16x16xf32, #tpu.memory_space<vmem>>, vector<8x16x16xf32>
    %c0_2 = arith.constant 0 : index
    %c1 = arith.constant 1 : index
    %c1_3 = arith.constant 1 : index
    %1 = vector.load %arg2[%c0_2, %c1, %c1_3] : memref<8x18x18xf32, #tpu.memory_space<vmem>>, vector<8x16x16xf32>
    tpu.vector_store %arg2[%c0_2, %c1, %c1_3], %0 {strides = array<i32>} : memref<8x18x18xf32, #tpu.memory_space<vmem>>, vector<8x16x16xf32>,
    %2 = vector.extract_strided_slice %0 {offsets = [0, 0, 0], sizes = [8, 1, 16], strides = [1, 1, 1]} : vector<8x16x16xf32> to vector<8x1x16xf32>
    %c0_4 = arith.constant 0 : index
    %c0_5 = arith.constant 0 : index
    %c1_6 = arith.constant 1 : index
    %3 = vector.load %arg2[%c0_4, %c0_5, %c1_6] : memref<8x18x18xf32, #tpu.memory_space<vmem>>, vector<8x1x16xf32>
    tpu.vector_store %arg2[%c0_4, %c0_5, %c1_6], %2 {strides = array<i32>} : memref<8x18x18xf32, #tpu.memory_space<vmem>>, vector<8x1x16xf32>,
    %4 = vector.extract_strided_slice %0 {offsets = [0, 15, 0], sizes = [8, 1, 16], strides = [1, 1, 1]} : vector<8x16x16xf32> to vector<8x1x16xf32>
    %c0_7 = arith.constant 0 : index
    %c17 = arith.constant 17 : index
    %c1_8 = arith.constant 1 : index
    %5 = vector.load %arg2[%c0_7, %c17, %c1_8] : memref<8x18x18xf32, #tpu.memory_space<vmem>>, vector<8x1x16xf32>
    tpu.vector_store %arg2[%c0_7, %c17, %c1_8], %4 {strides = array<i32>} : memref<8x18x18xf32, #tpu.memory_space<vmem>>, vector<8x1x16xf32>,
    %6 = tpu.iota {dimensions = array<i32: 1>} : vector<8x18x1xi32>
    %c0_i32 = arith.constant 0 : i32
    %7 = vector.broadcast %c0_i32 : i32 to vector<8x18x1xi32>
    %8 = arith.cmpi eq, %6, %7 : vector<8x18x1xi32>
    %c17_i32 = arith.constant 17 : i32
    %9 = vector.broadcast %c17_i32 : i32 to vector<8x18x1xi32>
    %10 = arith.cmpi eq, %6, %9 : vector<8x18x1xi32>
    %c0_9 = arith.constant 0 : index
    %c0_10 = arith.constant 0 : index
    %c1_11 = arith.constant 1 : index
    %11 = vector.load %arg2[%c0_9, %c0_10, %c1_11] : memref<8x18x18xf32, #tpu.memory_space<vmem>>, vector<8x18x1xf32>
    %12 = vector.extract_strided_slice %0 {offsets = [0, 0, 0], sizes = [8, 1, 1], strides = [1, 1, 1]} : vector<8x16x16xf32> to vector<8x1x1xf32>
    %13 = vector.extract_strided_slice %0 {offsets = [0, 15, 0], sizes = [8, 1, 1], strides = [1, 1, 1]} : vector<8x16x16xf32> to vector<8x1x1xf32>
    %14 = vector.shape_cast %13 : vector<8x1x1xf32> to vector<8x1x1xf32>
    %15 = vector.broadcast %14 : vector<8x1x1xf32> to vector<8x18x1xf32>
    %16 = arith.select %10, %15, %11 : vector<8x18x1xi1>, vector<8x18x1xf32>
    %17 = vector.shape_cast %12 : vector<8x1x1xf32> to vector<8x1x1xf32>
    %18 = vector.broadcast %17 : vector<8x1x1xf32> to vector<8x18x1xf32>
    %19 = arith.select %8, %18, %16 : vector<8x18x1xi1>, vector<8x18x1xf32>
    %cst = arith.constant 0.000000e+00 : f32
    %20 = vector.broadcast %cst : f32 to vector<8x18x1xf32>
    %21 = arith.subf %20, %19 : vector<8x18x1xf32>
    %c0_12 = arith.constant 0 : index
    %c0_13 = arith.constant 0 : index
    %c0_14 = arith.constant 0 : index
    %22 = vector.load %arg2[%c0_12, %c0_13, %c0_14] : memref<8x18x18xf32, #tpu.memory_space<vmem>>, vector<8x18x1xf32>
    tpu.vector_store %arg2[%c0_12, %c0_13, %c0_14], %21 {strides = array<i32>} : memref<8x18x18xf32, #tpu.memory_space<vmem>>, vector<8x18x1xf32>,
    %c0_15 = arith.constant 0 : index
    %c0_16 = arith.constant 0 : index
    %c16 = arith.constant 16 : index
    %23 = vector.load %arg2[%c0_15, %c0_16, %c16] : memref<8x18x18xf32, #tpu.memory_space<vmem>>, vector<8x18x1xf32>
    %24 = vector.extract_strided_slice %0 {offsets = [0, 0, 15], sizes = [8, 1, 1], strides = [1, 1, 1]} : vector<8x16x16xf32> to vector<8x1x1xf32>
    %25 = vector.extract_strided_slice %0 {offsets = [0, 15, 15], sizes = [8, 1, 1], strides = [1, 1, 1]} : vector<8x16x16xf32> to vector<8x1x1xf32>
    %26 = vector.shape_cast %25 : vector<8x1x1xf32> to vector<8x1x1xf32>
    %27 = vector.broadcast %26 : vector<8x1x1xf32> to vector<8x18x1xf32>
    %28 = arith.select %10, %27, %23 : vector<8x18x1xi1>, vector<8x18x1xf32>
    %29 = vector.shape_cast %24 : vector<8x1x1xf32> to vector<8x1x1xf32>
    %30 = vector.broadcast %29 : vector<8x1x1xf32> to vector<8x18x1xf32>
    %31 = arith.select %8, %30, %28 : vector<8x18x1xi1>, vector<8x18x1xf32>
    %cst_17 = arith.constant 0.000000e+00 : f32
    %32 = vector.broadcast %cst_17 : f32 to vector<8x18x1xf32>
    %33 = arith.subf %32, %31 : vector<8x18x1xf32>
    %c0_18 = arith.constant 0 : index
    %c0_19 = arith.constant 0 : index
    %c17_20 = arith.constant 17 : index
    %34 = vector.load %arg2[%c0_18, %c0_19, %c17_20] : memref<8x18x18xf32, #tpu.memory_space<vmem>>, vector<8x18x1xf32>
    tpu.vector_store %arg2[%c0_18, %c0_19, %c17_20], %33 {strides = array<i32>} : memref<8x18x18xf32, #tpu.memory_space<vmem>>, vector<8x18x1xf32>,
    return
  }
  func.func @transform_0(%arg0: i32) -> (i32, i32, i32) {
    %c0_i32 = arith.constant 0 : i32
    %c0_i32_0 = arith.constant 0 : i32
    %c0_i32_1 = arith.constant 0 : i32
    return %arg0, %c0_i32, %c0_i32_0 : i32, i32, i32
  }
  func.func @transform_1(%arg0: i32) -> (i32, i32, i32) {
    %c0_i32 = arith.constant 0 : i32
    %c0_i32_0 = arith.constant 0 : i32
    %c0_i32_1 = arith.constant 0 : i32
    return %arg0, %c0_i32, %c0_i32_0 : i32, i32, i32
  }
}

</mosaic_0001>

<llo_original>
// kernel: tpu_custom_call.1
$region0: #{tpu_custom_call.1}
  #allocation0 [shape = 'u32[]', space=smem, size = 0x4, offset = 0x4, fixed_abs, tag = 'smem constant byte address 0x4 - core index']
  #allocation1 [shape = 'u32[72,128]{1,0:T(1,128)}', space=vmem, size = 0x9000, scoped, tag = 'internal scratch']
  %s0 = inlined_call_operand.hbm [shape: f32[8,16,16], index: 0, kind: input, shape index: {}]
  %s1 = inlined_call_operand.vmem [shape: f32[8,18,18], index: 1, kind: output, shape index: {}]
  %s2 = sld [smem:[#allocation0]]
  $region18: #{tpu_custom_call.1} parent=0
    _
  %s4 = ssub.s32 1, %s2
  %s5 = scalar_select 0, %s4, %s2
  $region1: #{tpu_custom_call.1} parent=0
    #allocation2 [shape = 'u8[65536]{0}', space=vmem, size = 0x10000, scoped, tag = 'input window, operand 0, single buffered']
    #allocation3 [shape = 's32[1]{0}', space=sflag, size = 0x4, scoped, tag = 'scoped memory for tpu_custom_call.1']
    %6 = vsyncpa [#allocation3], 0
    // Predicated region
    $region2: #{tpu_custom_call.1} parent=1 // pred_check
      _
    $region3: #{tpu_custom_call.1} parent=1 // pred_check_branch
      %8 = sbr.rel (0) target = $region5
    $region4: #{tpu_custom_call.1} parent=1 // pred_region
      %10 = vsyncadd [#allocation3], 0
      %s11 = sshll.u32 %s0, 4
      %s12 = int_to_ptr.hbm [resolvable:$true] %s11
      %s13 = sshll.u32 [#allocation2], 4
      %s14 = int_to_ptr.vmem [resolvable:$true] %s13
      %19 = dma.hbm_to_vmem [thread:$0]  %s12, 2048, %s14, [#allocation3], 128, 128, 8
    $region5: #{tpu_custom_call.1} parent=1 // pred_fallthru
      _
    // Predicated region
    $region6: #{tpu_custom_call.1} parent=1 // pred_check
      _
    $region7: #{tpu_custom_call.1} parent=1 // pred_check_branch
      %21 = sbr.rel (0) target = $region9
    $region8: #{tpu_custom_call.1} parent=1 // pred_region
      %23 = dma.done [#allocation3], 2048
    $region9: #{tpu_custom_call.1} parent=1 // pred_fallthru
      _
    %v24 = vld [vmem:[#allocation2] sm:$0xff]
    %v25 = vld [vmem:[#allocation2 + $0x8] sm:$0xff]
    %v26 = vld [vmem:[#allocation2 + $0x10] sm:$0xff]
    %v27 = vld [vmem:[#allocation2 + $0x18] sm:$0xff]
    %v28 = vld [vmem:[#allocation2 + $0x20] sm:$0xff]
    %v29 = vld [vmem:[#allocation2 + $0x28] sm:$0xff]
    %v30 = vld [vmem:[#allocation2 + $0x30] sm:$0xff]
    %v31 = vld [vmem:[#allocation2 + $0x38] sm:$0xff]
    %v32 = vld [vmem:[#allocation2 + $0x40] sm:$0xff]
    %v33 = vld [vmem:[#allocation2 + $0x48] sm:$0xff]
    %v34 = vld [vmem:[#allocation2 + $0x50] sm:$0xff]
    %v35 = vld [vmem:[#allocation2 + $0x58] sm:$0xff]
    %v36 = vld [vmem:[#allocation2 + $0x60] sm:$0xff]
    %v37 = vld [vmem:[#allocation2 + $0x68] sm:$0xff]
    %v38 = vld [vmem:[#allocation2 + $0x70] sm:$0xff]
    %v39 = vld [vmem:[#allocation2 + $0x78] sm:$0xff]
    %56 = vrot.lane.b32.xlu0 %v24, 1
    %v57 = vpop.permute.xlu0 %56
    %58 = vrot.lane.b32.xlu0 %v25, 1
    %v59 = vpop.permute.xlu0 %58
    %60 = vrot.lane.b32.xlu0 %v26, 1
    %v61 = vpop.permute.xlu0 %60
    %62 = vrot.lane.b32.xlu0 %v27, 1
    %v63 = vpop.permute.xlu0 %62
    %64 = vrot.lane.b32.xlu0 %v28, 1
    %v65 = vpop.permute.xlu0 %64
    %66 = vrot.lane.b32.xlu0 %v29, 1
    %v67 = vpop.permute.xlu0 %66
    %68 = vrot.lane.b32.xlu0 %v30, 1
    %v69 = vpop.permute.xlu0 %68
    %70 = vrot.lane.b32.xlu0 %v31, 1
    %v71 = vpop.permute.xlu0 %70
    %72 = vrot.lane.b32.xlu0 %v32, 1
    %v73 = vpop.permute.xlu0 %72
    %74 = vrot.lane.b32.xlu0 %v33, 1
    %v75 = vpop.permute.xlu0 %74
    %76 = vrot.lane.b32.xlu0 %v34, 1
    %v77 = vpop.permute.xlu0 %76
    %78 = vrot.lane.b32.xlu0 %v35, 1
    %v79 = vpop.permute.xlu0 %78
    %80 = vrot.lane.b32.xlu0 %v36, 1
    %v81 = vpop.permute.xlu0 %80
    %82 = vrot.lane.b32.xlu0 %v37, 1
    %v83 = vpop.permute.xlu0 %82
    %84 = vrot.lane.b32.xlu0 %v38, 1
    %v85 = vpop.permute.xlu0 %84
    %86 = vrot.lane.b32.xlu0 %v39, 1
    %v87 = vpop.permute.xlu0 %86
    %vm104 = vcmask 138248
    %105 = vst.msk [vmem:[%s1 + $0x1] sm:$0xff] %vm104, %v57
    %106 = vst.msk [vmem:[%s1 + $0x9] sm:$0xff] %vm104, %v59
    %107 = vst.msk [vmem:[%s1 + $0x19] sm:$0xff] %vm104, %v61
    %108 = vst.msk [vmem:[%s1 + $0x21] sm:$0xff] %vm104, %v63
    %109 = vst.msk [vmem:[%s1 + $0x31] sm:$0xff] %vm104, %v65
    %110 = vst.msk [vmem:[%s1 + $0x39] sm:$0xff] %vm104, %v67
    %111 = vst.msk [vmem:[%s1 + $0x49] sm:$0xff] %vm104, %v69
    %112 = vst.msk [vmem:[%s1 + $0x51] sm:$0xff] %vm104, %v71
    %113 = vst.msk [vmem:[%s1 + $0x61] sm:$0xff] %vm104, %v73
    %114 = vst.msk [vmem:[%s1 + $0x69] sm:$0xff] %vm104, %v75
    %115 = vst.msk [vmem:[%s1 + $0x79] sm:$0xff] %vm104, %v77
    %116 = vst.msk [vmem:[%s1 + $0x81] sm:$0xff] %vm104, %v79
    %117 = vst.msk [vmem:[%s1 + $0x91] sm:$0xff] %vm104, %v81
    %118 = vst.msk [vmem:[%s1 + $0x99] sm:$0xff] %vm104, %v83
    %119 = vst.msk [vmem:[%s1 + $0xa9] sm:$0xff] %vm104, %v85
    %120 = vst.msk [vmem:[%s1 + $0xb1] sm:$0xff] %vm104, %v87
    %vm121 = vcmask 131080
    %122 = vst.msk [vmem:[%s1] sm:$0x1] %vm121, %v57
    %123 = vst.msk [vmem:[%s1 + $0x18] sm:$0x1] %vm121, %v61
    %124 = vst.msk [vmem:[%s1 + $0x30] sm:$0x1] %vm121, %v65
    %125 = vst.msk [vmem:[%s1 + $0x48] sm:$0x1] %vm121, %v69
    %126 = vst.msk [vmem:[%s1 + $0x60] sm:$0x1] %vm121, %v73
    %127 = vst.msk [vmem:[%s1 + $0x78] sm:$0x1] %vm121, %v77
    %128 = vst.msk [vmem:[%s1 + $0x90] sm:$0x1] %vm121, %v81
    %129 = vst.msk [vmem:[%s1 + $0xa8] sm:$0x1] %vm121, %v85
    %vm130 = vcmask 138255
    %131 = vst.msk [vmem:[%s1 + $0xa] sm:$0x80] %vm130, %v59
    %132 = vst.msk [vmem:[%s1 + $0x22] sm:$0x80] %vm130, %v63
    %133 = vst.msk [vmem:[%s1 + $0x3a] sm:$0x80] %vm130, %v67
    %134 = vst.msk [vmem:[%s1 + $0x52] sm:$0x80] %vm130, %v71
    %135 = vst.msk [vmem:[%s1 + $0x6a] sm:$0x80] %vm130, %v75
    %136 = vst.msk [vmem:[%s1 + $0x82] sm:$0x80] %vm130, %v79
    %137 = vst.msk [vmem:[%s1 + $0x9a] sm:$0x80] %vm130, %v83
    %138 = vst.msk [vmem:[%s1 + $0xb2] sm:$0x80] %vm130, %v87
    %v139 = vlaneseq
    %v140 = vshrl.u32 %v139, 7
    %v141 = vadd.s32 %v140, 8
    %v142 = vadd.s32 %v140, 16
    %vm143 = vcmp.eq.s32.totalorder %v140, 0
    %vm144 = vcmp.eq.s32.totalorder %v141, 0
    %vm145 = vcmp.eq.s32.totalorder %v142, 0
    %vm146 = vcmp.eq.s32.totalorder %v140, 17
    %vm147 = vcmp.eq.s32.totalorder %v141, 17
    %vm148 = vcmp.eq.s32.totalorder %v142, 17
    %v149 = vld [vmem:[%s1] sm:$0xff]
    %v150 = vld [vmem:[%s1 + $0x8] sm:$0xff]
    %v151 = vld [vmem:[%s1 + $0x10] sm:$0x3]
    %v152 = vld [vmem:[%s1 + $0x18] sm:$0xff]
    %v153 = vld [vmem:[%s1 + $0x20] sm:$0xff]
    %v154 = vld [vmem:[%s1 + $0x28] sm:$0x3]
    %v155 = vld [vmem:[%s1 + $0x30] sm:$0xff]
    %v156 = vld [vmem:[%s1 + $0x38] sm:$0xff]
    %v157 = vld [vmem:[%s1 + $0x40] sm:$0x3]
    %v158 = vld [vmem:[%s1 + $0x48] sm:$0xff]
    %v159 = vld [vmem:[%s1 + $0x50] sm:$0xff]
    %v160 = vld [vmem:[%s1 + $0x58] sm:$0x3]
    %v161 = vld [vmem:[%s1 + $0x60] sm:$0xff]
    %v162 = vld [vmem:[%s1 + $0x68] sm:$0xff]
    %v163 = vld [vmem:[%s1 + $0x70] sm:$0x3]
    %v164 = vld [vmem:[%s1 + $0x78] sm:$0xff]
    %v165 = vld [vmem:[%s1 + $0x80] sm:$0xff]
    %v166 = vld [vmem:[%s1 + $0x88] sm:$0x3]
    %v167 = vld [vmem:[%s1 + $0x90] sm:$0xff]
    %v168 = vld [vmem:[%s1 + $0x98] sm:$0xff]
    %v169 = vld [vmem:[%s1 + $0xa0] sm:$0x3]
    %v170 = vld [vmem:[%s1 + $0xa8] sm:$0xff]
    %v171 = vld [vmem:[%s1 + $0xb0] sm:$0xff]
    %v172 = vld [vmem:[%s1 + $0xb8] sm:$0x3]
    %v173 = vperm.slane %v25, 7
    %v174 = vperm.slane %v27, 7
    %v175 = vperm.slane %v29, 7
    %v176 = vperm.slane %v31, 7
    %v177 = vperm.slane %v33, 7
    %v178 = vperm.slane %v35, 7
    %v179 = vperm.slane %v37, 7
    %v180 = vperm.slane %v39, 7
    %205 = vrot.lane.b32.xlu0 %v149, 127
    %v206 = vpop.permute.xlu0 %205
    %207 = vrot.lane.b32.xlu0 %v150, 127
    %v208 = vpop.permute.xlu0 %207
    %209 = vrot.lane.b32.xlu0 %v151, 127
    %v210 = vpop.permute.xlu0 %209
    %211 = vrot.lane.b32.xlu0 %v152, 127
    %v212 = vpop.permute.xlu0 %211
    %213 = vrot.lane.b32.xlu0 %v153, 127
    %v214 = vpop.permute.xlu0 %213
    %215 = vrot.lane.b32.xlu0 %v154, 127
    %v216 = vpop.permute.xlu0 %215
    %217 = vrot.lane.b32.xlu0 %v155, 127
    %v218 = vpop.permute.xlu0 %217
    %219 = vrot.lane.b32.xlu0 %v156, 127
    %v220 = vpop.permute.xlu0 %219
    %221 = vrot.lane.b32.xlu0 %v157, 127
    %v222 = vpop.permute.xlu0 %221
    %223 = vrot.lane.b32.xlu0 %v158, 127
    %v224 = vpop.permute.xlu0 %223
    %225 = vrot.lane.b32.xlu0 %v159, 127
    %v226 = vpop.permute.xlu0 %225
    %227 = vrot.lane.b32.xlu0 %v160, 127
    %v228 = vpop.permute.xlu0 %227
    %229 = vrot.lane.b32.xlu0 %v161, 127
    %v230 = vpop.permute.xlu0 %229
    %231 = vrot.lane.b32.xlu0 %v162, 127
    %v232 = vpop.permute.xlu0 %231
    %233 = vrot.lane.b32.xlu0 %v163, 127
    %v234 = vpop.permute.xlu0 %233
    %235 = vrot.lane.b32.xlu0 %v164, 127
    %v236 = vpop.permute.xlu0 %235
    %237 = vrot.lane.b32.xlu0 %v165, 127
    %v238 = vpop.permute.xlu0 %237
    %239 = vrot.lane.b32.xlu0 %v166, 127
    %v240 = vpop.permute.xlu0 %239
    %241 = vrot.lane.b32.xlu0 %v167, 127
    %v242 = vpop.permute.xlu0 %241
    %243 = vrot.lane.b32.xlu0 %v168, 127
    %v244 = vpop.permute.xlu0 %243
    %245 = vrot.lane.b32.xlu0 %v169, 127
    %v246 = vpop.permute.xlu0 %245
    %247 = vrot.lane.b32.xlu0 %v170, 127
    %v248 = vpop.permute.xlu0 %247
    %249 = vrot.lane.b32.xlu0 %v171, 127
    %v250 = vpop.permute.xlu0 %249
    %251 = vrot.lane.b32.xlu0 %v172, 127
    %v252 = vpop.permute.xlu0 %251
    %v277 = vsel %vm146, %v173, %v206
    %v278 = vsel %vm147, %v173, %v208
    %v279 = vsel %vm148, %v173, %v210
    %v280 = vsel %vm146, %v174, %v212
    %v281 = vsel %vm147, %v174, %v214
    %v282 = vsel %vm148, %v174, %v216
    %v283 = vsel %vm146, %v175, %v218
    %v284 = vsel %vm147, %v175, %v220
    %v285 = vsel %vm148, %v175, %v222
    %v286 = vsel %vm146, %v176, %v224
    %v287 = vsel %vm147, %v176, %v226
    %v288 = vsel %vm148, %v176, %v228
    %v289 = vsel %vm146, %v177, %v230
    %v290 = vsel %vm147, %v177, %v232
    %v291 = vsel %vm148, %v177, %v234
    %v292 = vsel %vm146, %v178, %v236
    %v293 = vsel %vm147, %v178, %v238
    %v294 = vsel %vm148, %v178, %v240
    %v295 = vsel %vm146, %v179, %v242
    %v296 = vsel %vm147, %v179, %v244
    %v297 = vsel %vm148, %v179, %v246
    %v298 = vsel %vm146, %v180, %v248
    %v299 = vsel %vm147, %v180, %v250
    %v300 = vsel %vm148, %v180, %v252
    %v301 = vperm.slane %v24, 0
    %v302 = vperm.slane %v26, 0
    %v303 = vperm.slane %v28, 0
    %v304 = vperm.slane %v30, 0
    %v305 = vperm.slane %v32, 0
    %v306 = vperm.slane %v34, 0
    %v307 = vperm.slane %v36, 0
    %v308 = vperm.slane %v38, 0
    %v309 = vsel %vm143, %v301, %v277
    %v310 = vsel %vm144, %v301, %v278
    %v311 = vsel %vm145, %v301, %v279
    %v312 = vsel %vm143, %v302, %v280
    %v313 = vsel %vm144, %v302, %v281
    %v314 = vsel %vm145, %v302, %v282
    %v315 = vsel %vm143, %v303, %v283
    %v316 = vsel %vm144, %v303, %v284
    %v317 = vsel %vm145, %v303, %v285
    %v318 = vsel %vm143, %v304, %v286
    %v319 = vsel %vm144, %v304, %v287
    %v320 = vsel %vm145, %v304, %v288
    %v321 = vsel %vm143, %v305, %v289
    %v322 = vsel %vm144, %v305, %v290
    %v323 = vsel %vm145, %v305, %v291
    %v324 = vsel %vm143, %v306, %v292
    %v325 = vsel %vm144, %v306, %v293
    %v326 = vsel %vm145, %v306, %v294
    %v327 = vsel %vm143, %v307, %v295
    %v328 = vsel %vm144, %v307, %v296
    %v329 = vsel %vm145, %v307, %v297
    %v330 = vsel %vm143, %v308, %v298
    %v331 = vsel %vm144, %v308, %v299
    %v332 = vsel %vm145, %v308, %v300
    %v333 = vsub.f32 0.0, %v309
    %v334 = vsub.f32 0.0, %v310
    %v335 = vsub.f32 0.0, %v311
    %v336 = vsub.f32 0.0, %v312
    %v337 = vsub.f32 0.0, %v313
    %v338 = vsub.f32 0.0, %v314
    %v339 = vsub.f32 0.0, %v315
    %v340 = vsub.f32 0.0, %v316
    %v341 = vsub.f32 0.0, %v317
    %v342 = vsub.f32 0.0, %v318
    %v343 = vsub.f32 0.0, %v319
    %v344 = vsub.f32 0.0, %v320
    %v345 = vsub.f32 0.0, %v321
    %v346 = vsub.f32 0.0, %v322
    %v347 = vsub.f32 0.0, %v323
    %v348 = vsub.f32 0.0, %v324
    %v349 = vsub.f32 0.0, %v325
    %v350 = vsub.f32 0.0, %v326
    %v351 = vsub.f32 0.0, %v327
    %v352 = vsub.f32 0.0, %v328
    %v353 = vsub.f32 0.0, %v329
    %v354 = vsub.f32 0.0, %v330
    %v355 = vsub.f32 0.0, %v331
    %v356 = vsub.f32 0.0, %v332
    %vm357 = vcmask 7168
    %358 = vst.msk [vmem:[%s1] sm:$0xff] %vm357, %v333
    %359 = vst.msk [vmem:[%s1 + $0x8] sm:$0xff] %vm357, %v334
    %vm360 = vcmask 1024
    %361 = vst.msk [vmem:[%s1 + $0x10] sm:$0x3] %vm360, %v335
    %362 = vst.msk [vmem:[%s1 + $0x18] sm:$0xff] %vm357, %v336
    %363 = vst.msk [vmem:[%s1 + $0x20] sm:$0xff] %vm357, %v337
    %364 = vst.msk [vmem:[%s1 + $0x28] sm:$0x3] %vm360, %v338
    %365 = vst.msk [vmem:[%s1 + $0x30] sm:$0xff] %vm357, %v339
    %366 = vst.msk [vmem:[%s1 + $0x38] sm:$0xff] %vm357, %v340
    %367 = vst.msk [vmem:[%s1 + $0x40] sm:$0x3] %vm360, %v341
    %368 = vst.msk [vmem:[%s1 + $0x48] sm:$0xff] %vm357, %v342
    %369 = vst.msk [vmem:[%s1 + $0x50] sm:$0xff] %vm357, %v343
    %370 = vst.msk [vmem:[%s1 + $0x58] sm:$0x3] %vm360, %v344
    %371 = vst.msk [vmem:[%s1 + $0x60] sm:$0xff] %vm357, %v345
    %372 = vst.msk [vmem:[%s1 + $0x68] sm:$0xff] %vm357, %v346
    %373 = vst.msk [vmem:[%s1 + $0x70] sm:$0x3] %vm360, %v347
    %374 = vst.msk [vmem:[%s1 + $0x78] sm:$0xff] %vm357, %v348
    %375 = vst.msk [vmem:[%s1 + $0x80] sm:$0xff] %vm357, %v349
    %376 = vst.msk [vmem:[%s1 + $0x88] sm:$0x3] %vm360, %v350
    %377 = vst.msk [vmem:[%s1 + $0x90] sm:$0xff] %vm357, %v351
    %378 = vst.msk [vmem:[%s1 + $0x98] sm:$0xff] %vm357, %v352
    %379 = vst.msk [vmem:[%s1 + $0xa0] sm:$0x3] %vm360, %v353
    %380 = vst.msk [vmem:[%s1 + $0xa8] sm:$0xff] %vm357, %v354
    %381 = vst.msk [vmem:[%s1 + $0xb0] sm:$0xff] %vm357, %v355
    %382 = vst.msk [vmem:[%s1 + $0xb8] sm:$0x3] %vm360, %v356
    %v383 = vld [vmem:[%s1] sm:$0xff]
    %v384 = vld [vmem:[%s1 + $0x8] sm:$0xff]
    %v385 = vld [vmem:[%s1 + $0x10] sm:$0x3]
    %v386 = vld [vmem:[%s1 + $0x18] sm:$0xff]
    %v387 = vld [vmem:[%s1 + $0x20] sm:$0xff]
    %v388 = vld [vmem:[%s1 + $0x28] sm:$0x3]
    %v389 = vld [vmem:[%s1 + $0x30] sm:$0xff]
    %v390 = vld [vmem:[%s1 + $0x38] sm:$0xff]
    %v391 = vld [vmem:[%s1 + $0x40] sm:$0x3]
    %v392 = vld [vmem:[%s1 + $0x48] sm:$0xff]
    %v393 = vld [vmem:[%s1 + $0x50] sm:$0xff]
    %v394 = vld [vmem:[%s1 + $0x58] sm:$0x3]
    %v395 = vld [vmem:[%s1 + $0x60] sm:$0xff]
    %v396 = vld [vmem:[%s1 + $0x68] sm:$0xff]
    %v397 = vld [vmem:[%s1 + $0x70] sm:$0x3]
    %v398 = vld [vmem:[%s1 + $0x78] sm:$0xff]
    %v399 = vld [vmem:[%s1 + $0x80] sm:$0xff]
    %v400 = vld [vmem:[%s1 + $0x88] sm:$0x3]
    %v401 = vld [vmem:[%s1 + $0x90] sm:$0xff]
    %v402 = vld [vmem:[%s1 + $0x98] sm:$0xff]
    %v403 = vld [vmem:[%s1 + $0xa0] sm:$0x3]
    %v404 = vld [vmem:[%s1 + $0xa8] sm:$0xff]
    %v405 = vld [vmem:[%s1 + $0xb0] sm:$0xff]
    %v406 = vld [vmem:[%s1 + $0xb8] sm:$0x3]
    %431 = vrot.lane.b32.xlu0 %v383, 127
    %v432 = vpop.permute.xlu0 %431
    %433 = vrot.lane.b32.xlu0 %v384, 127
    %v434 = vpop.permute.xlu0 %433
    %435 = vrot.lane.b32.xlu0 %v385, 127
    %v436 = vpop.permute.xlu0 %435
    %437 = vrot.lane.b32.xlu0 %v386, 127
    %v438 = vpop.permute.xlu0 %437
    %439 = vrot.lane.b32.xlu0 %v387, 127
    %v440 = vpop.permute.xlu0 %439
    %441 = vrot.lane.b32.xlu0 %v388, 127
    %v442 = vpop.permute.xlu0 %441
    %443 = vrot.lane.b32.xlu0 %v389, 127
    %v444 = vpop.permute.xlu0 %443
    %445 = vrot.lane.b32.xlu0 %v390, 127
    %v446 = vpop.permute.xlu0 %445
    %447 = vrot.lane.b32.xlu0 %v391, 127
    %v448 = vpop.permute.xlu0 %447
    %449 = vrot.lane.b32.xlu0 %v392, 127
    %v450 = vpop.permute.xlu0 %449
    %451 = vrot.lane.b32.xlu0 %v393, 127
    %v452 = vpop.permute.xlu0 %451
    %453 = vrot.lane.b32.xlu0 %v394, 127
    %v454 = vpop.permute.xlu0 %453
    %455 = vrot.lane.b32.xlu0 %v395, 127
    %v456 = vpop.permute.xlu0 %455
    %457 = vrot.lane.b32.xlu0 %v396, 127
    %v458 = vpop.permute.xlu0 %457
    %459 = vrot.lane.b32.xlu0 %v397, 127
    %v460 = vpop.permute.xlu0 %459
    %461 = vrot.lane.b32.xlu0 %v398, 127
    %v462 = vpop.permute.xlu0 %461
    %463 = vrot.lane.b32.xlu0 %v399, 127
    %v464 = vpop.permute.xlu0 %463
    %465 = vrot.lane.b32.xlu0 %v400, 127
    %v466 = vpop.permute.xlu0 %465
    %467 = vrot.lane.b32.xlu0 %v401, 127
    %v468 = vpop.permute.xlu0 %467
    %469 = vrot.lane.b32.xlu0 %v402, 127
    %v470 = vpop.permute.xlu0 %469
    %471 = vrot.lane.b32.xlu0 %v403, 127
    %v472 = vpop.permute.xlu0 %471
    %473 = vrot.lane.b32.xlu0 %v404, 127
    %v474 = vpop.permute.xlu0 %473
    %475 = vrot.lane.b32.xlu0 %v405, 127
    %v476 = vpop.permute.xlu0 %475
    %477 = vrot.lane.b32.xlu0 %v406, 127
    %v478 = vpop.permute.xlu0 %477
    %v503 = vsel %vm146, %v173, %v432
    %v504 = vsel %vm147, %v173, %v434
    %v505 = vsel %vm148, %v173, %v436
    %v506 = vsel %vm146, %v174, %v438
    %v507 = vsel %vm147, %v174, %v440
    %v508 = vsel %vm148, %v174, %v442
    %v509 = vsel %vm146, %v175, %v444
    %v510 = vsel %vm147, %v175, %v446
    %v511 = vsel %vm148, %v175, %v448
    %v512 = vsel %vm146, %v176, %v450
    %v513 = vsel %vm147, %v176, %v452
    %v514 = vsel %vm148, %v176, %v454
    %v515 = vsel %vm146, %v177, %v456
    %v516 = vsel %vm147, %v177, %v458
    %v517 = vsel %vm148, %v177, %v460
    %v518 = vsel %vm146, %v178, %v462
    %v519 = vsel %vm147, %v178, %v464
    %v520 = vsel %vm148, %v178, %v466
    %v521 = vsel %vm146, %v179, %v468
    %v522 = vsel %vm147, %v179, %v470
    %v523 = vsel %vm148, %v179, %v472
    %v524 = vsel %vm146, %v180, %v474
    %v525 = vsel %vm147, %v180, %v476
    %v526 = vsel %vm148, %v180, %v478
    %v527 = vsel %vm143, %v301, %v503
    %v528 = vsel %vm144, %v301, %v504
    %v529 = vsel %vm145, %v301, %v505
    %v530 = vsel %vm143, %v302, %v506
    %v531 = vsel %vm144, %v302, %v507
    %v532 = vsel %vm145, %v302, %v508
    %v533 = vsel %vm143, %v303, %v509
    %v534 = vsel %vm144, %v303, %v510
    %v535 = vsel %vm145, %v303, %v511
    %v536 = vsel %vm143, %v304, %v512
    %v537 = vsel %vm144, %v304, %v513
    %v538 = vsel %vm145, %v304, %v514
    %v539 = vsel %vm143, %v305, %v515
    %v540 = vsel %vm144, %v305, %v516
    %v541 = vsel %vm145, %v305, %v517
    %v542 = vsel %vm143, %v306, %v518
    %v543 = vsel %vm144, %v306, %v519
    %v544 = vsel %vm145, %v306, %v520
    %v545 = vsel %vm143, %v307, %v521
    %v546 = vsel %vm144, %v307, %v522
    %v547 = vsel %vm145, %v307, %v523
    %v548 = vsel %vm143, %v308, %v524
    %v549 = vsel %vm144, %v308, %v525
    %v550 = vsel %vm145, %v308, %v526
    %v551 = vsub.f32 0.0, %v527
    %v552 = vsub.f32 0.0, %v528
    %v553 = vsub.f32 0.0, %v529
    %v554 = vsub.f32 0.0, %v530
    %v555 = vsub.f32 0.0, %v531
    %v556 = vsub.f32 0.0, %v532
    %v557 = vsub.f32 0.0, %v533
    %v558 = vsub.f32 0.0, %v534
    %v559 = vsub.f32 0.0, %v535
    %v560 = vsub.f32 0.0, %v536
    %v561 = vsub.f32 0.0, %v537
    %v562 = vsub.f32 0.0, %v538
    %v563 = vsub.f32 0.0, %v539
    %v564 = vsub.f32 0.0, %v540
    %v565 = vsub.f32 0.0, %v541
    %v566 = vsub.f32 0.0, %v542
    %v567 = vsub.f32 0.0, %v543
    %v568 = vsub.f32 0.0, %v544
    %v569 = vsub.f32 0.0, %v545
    %v570 = vsub.f32 0.0, %v546
    %v571 = vsub.f32 0.0, %v547
    %v572 = vsub.f32 0.0, %v548
    %v573 = vsub.f32 0.0, %v549
    %v574 = vsub.f32 0.0, %v550
    %599 = vrot.lane.b32.xlu0 %v551, 2
    %v600 = vpop.permute.xlu0 %599
    %601 = vrot.lane.b32.xlu0 %v552, 2
    %v602 = vpop.permute.xlu0 %601
    %603 = vrot.lane.b32.xlu0 %v553, 2
    %v604 = vpop.permute.xlu0 %603
    %605 = vrot.lane.b32.xlu0 %v554, 2
    %v606 = vpop.permute.xlu0 %605
    %607 = vrot.lane.b32.xlu0 %v555, 2
    %v608 = vpop.permute.xlu0 %607
    %609 = vrot.lane.b32.xlu0 %v556, 2
    %v610 = vpop.permute.xlu0 %609
    %611 = vrot.lane.b32.xlu0 %v557, 2
    %v612 = vpop.permute.xlu0 %611
    %613 = vrot.lane.b32.xlu0 %v558, 2
    %v614 = vpop.permute.xlu0 %613
    %615 = vrot.lane.b32.xlu0 %v559, 2
    %v616 = vpop.permute.xlu0 %615
    %617 = vrot.lane.b32.xlu0 %v560, 2
    %v618 = vpop.permute.xlu0 %617
    %619 = vrot.lane.b32.xlu0 %v561, 2
    %v620 = vpop.permute.xlu0 %619
    %621 = vrot.lane.b32.xlu0 %v562, 2
    %v622 = vpop.permute.xlu0 %621
    %623 = vrot.lane.b32.xlu0 %v563, 2
    %v624 = vpop.permute.xlu0 %623
    %625 = vrot.lane.b32.xlu0 %v564, 2
    %v626 = vpop.permute.xlu0 %625
    %627 = vrot.lane.b32.xlu0 %v565, 2
    %v628 = vpop.permute.xlu0 %627
    %629 = vrot.lane.b32.xlu0 %v566, 2
    %v630 = vpop.permute.xlu0 %629
    %631 = vrot.lane.b32.xlu0 %v567, 2
    %v632 = vpop.permute.xlu0 %631
    %633 = vrot.lane.b32.xlu0 %v568, 2
    %v634 = vpop.permute.xlu0 %633
    %635 = vrot.lane.b32.xlu0 %v569, 2
    %v636 = vpop.permute.xlu0 %635
    %637 = vrot.lane.b32.xlu0 %v570, 2
    %v638 = vpop.permute.xlu0 %637
    %639 = vrot.lane.b32.xlu0 %v571, 2
    %v640 = vpop.permute.xlu0 %639
    %641 = vrot.lane.b32.xlu0 %v572, 2
    %v642 = vpop.permute.xlu0 %641
    %643 = vrot.lane.b32.xlu0 %v573, 2
    %v644 = vpop.permute.xlu0 %643
    %645 = vrot.lane.b32.xlu0 %v574, 2
    %v646 = vpop.permute.xlu0 %645
    %vm671 = vcmask 146568
    %672 = vst.msk [vmem:[%s1] sm:$0xff] %vm671, %v600
    %673 = vst.msk [vmem:[%s1 + $0x8] sm:$0xff] %vm671, %v602
    %vm674 = vcmask 140424
    %675 = vst.msk [vmem:[%s1 + $0x10] sm:$0x3] %vm674, %v604
    %676 = vst.msk [vmem:[%s1 + $0x18] sm:$0xff] %vm671, %v606
    %677 = vst.msk [vmem:[%s1 + $0x20] sm:$0xff] %vm671, %v608
    %678 = vst.msk [vmem:[%s1 + $0x28] sm:$0x3] %vm674, %v610
    %679 = vst.msk [vmem:[%s1 + $0x30] sm:$0xff] %vm671, %v612
    %680 = vst.msk [vmem:[%s1 + $0x38] sm:$0xff] %vm671, %v614
    %681 = vst.msk [vmem:[%s1 + $0x40] sm:$0x3] %vm674, %v616
    %682 = vst.msk [vmem:[%s1 + $0x48] sm:$0xff] %vm671, %v618
    %683 = vst.msk [vmem:[%s1 + $0x50] sm:$0xff] %vm671, %v620
    %684 = vst.msk [vmem:[%s1 + $0x58] sm:$0x3] %vm674, %v622
    %685 = vst.msk [vmem:[%s1 + $0x60] sm:$0xff] %vm671, %v624
    %686 = vst.msk [vmem:[%s1 + $0x68] sm:$0xff] %vm671, %v626
    %687 = vst.msk [vmem:[%s1 + $0x70] sm:$0x3] %vm674, %v628
    %688 = vst.msk [vmem:[%s1 + $0x78] sm:$0xff] %vm671, %v630
    %689 = vst.msk [vmem:[%s1 + $0x80] sm:$0xff] %vm671, %v632
    %690 = vst.msk [vmem:[%s1 + $0x88] sm:$0x3] %vm674, %v634
    %691 = vst.msk [vmem:[%s1 + $0x90] sm:$0xff] %vm671, %v636
    %692 = vst.msk [vmem:[%s1 + $0x98] sm:$0xff] %vm671, %v638
    %693 = vst.msk [vmem:[%s1 + $0xa0] sm:$0x3] %vm674, %v640
    %694 = vst.msk [vmem:[%s1 + $0xa8] sm:$0xff] %vm671, %v642
    %695 = vst.msk [vmem:[%s1 + $0xb0] sm:$0xff] %vm671, %v644
    %696 = vst.msk [vmem:[%s1 + $0xb8] sm:$0x3] %vm674, %v646
    // Predicated region
    $region10: #{tpu_custom_call.1} parent=1 // pred_check
      _
    $region11: #{tpu_custom_call.1} parent=1 // pred_check_branch
      %698 = sbr.rel (0) target = $region13
    $region12: #{tpu_custom_call.1} parent=1 // pred_region
      _
    $region13: #{tpu_custom_call.1} parent=1 // pred_fallthru
      _
    // Predicated region
    $region14: #{tpu_custom_call.1} parent=1 // pred_check
      _
    $region15: #{tpu_custom_call.1} parent=1 // pred_check_branch
      %700 = sbr.rel (0) target = $region17
    $region16: #{tpu_custom_call.1} parent=1 // pred_region
      _
    $region17: #{tpu_custom_call.1} parent=1 // pred_fallthru
      _
    %701 = vsyncpa [#allocation3], 1

</llo_original>
